<compile_context>
chip_gen: v7x
topology: tpu7x:2x2x1
jax: 0.10.0
libtpu: 0.0.40
codegen_flags: <defaults>
</compile_context>

<pallas_src>
import functools

import jax
import jax.numpy as jnp
from jax.experimental import pallas as pl
from jax.experimental.pallas import tpu as pltpu

_LANE = 128      # vreg lane width
_SUBLANE = 8     # f32 sublane count


def _round_up(x, m):
    return ((x + m - 1) // m) * m


def _linear_kernel(x_ref, w_ref, b_ref, o_ref):
    # One MXU matmul on a lane-dense (TM, 896) x (896, 128) tile + VPU bias add.
    acc = jnp.dot(x_ref[...], w_ref[...], preferred_element_type=jnp.float32)
    o_ref[...] = (acc + b_ref[...]).astype(o_ref.dtype)


def prepare_params(w, b):
    """One-time glue: PyTorch layout (D_out, D_in) weight + (D_out,) bias ->
    persistent kernel layout w_t_pad (K_pad, N_pad), b_pad (1, N_pad)."""
    d_out, d_in = w.shape
    k_pad = _round_up(d_in, _LANE)    # 784 -> 896
    n_pad = _round_up(d_out, _LANE)   # 10  -> 128
    w_t_pad = jnp.zeros((k_pad, n_pad), w.dtype).at[:d_in, :d_out].set(w.T)
    b_pad = jnp.zeros((1, n_pad), b.dtype).at[0, :d_out].set(b)
    return w_t_pad, b_pad


@functools.partial(jax.jit, static_argnames=("d_out", "tm"))
def linear_forward(x, w_t_pad, b_pad, *, d_out, tm=512):
    """x: (B, D_in) f32, w_t_pad: (K_pad, N_pad), b_pad: (1, N_pad) -> (B, d_out)."""
    B, d_in = x.shape
    k_pad, n_pad = w_t_pad.shape

    # Batch tile: multiple of the f32 sublane count; small batches -> one tile,
    # large batches -> pipelined, mem-bound streaming over a "parallel" grid.
    tm = min(tm, _round_up(B, _SUBLANE))
    b_rows = _round_up(B, tm)

    # Zero-pad rows (batch) and the contraction (K) once per call.
    x_pad = jnp.zeros((b_rows, k_pad), x.dtype).at[:B, :d_in].set(x)

    # TODO(synk): optionally cast x/w to bf16 on v6e/v7x (keep f32 accumulate)
    # once batch sizes make this kernel MXU-bound; kept f32 for exact parity.
    out = pl.pallas_call(
        _linear_kernel,
        out_shape=jax.ShapeDtypeStruct((b_rows, n_pad), x.dtype),
        grid=(b_rows // tm,),
        in_specs=[
            pl.BlockSpec((tm, k_pad), lambda i: (i, 0)),       # stream batch tiles
            pl.BlockSpec((k_pad, n_pad), lambda i: (0, 0)),    # weight VMEM-resident
            pl.BlockSpec((1, n_pad), lambda i: (0, 0)),        # bias VMEM-resident
        ],
        out_specs=pl.BlockSpec((tm, n_pad), lambda i: (i, 0)),  # lane-dense stores
        compiler_params=pltpu.CompilerParams(
            dimension_semantics=("parallel",),                  # split across v7x TCs
        ),
    )(x_pad, w_t_pad, b_pad)

    return out[:B, :d_out]


def init_params(key, input_dim=784, output_dim=10):
    # Deterministic init mimicking torch.nn.Linear default:
    # U(-1/sqrt(in_features), 1/sqrt(in_features)) for both weight and bias.
    kw, kb = jax.random.split(key)
    bound = 1.0 / jnp.sqrt(jnp.float32(input_dim))
    w = jax.random.uniform(kw, (output_dim, input_dim), jnp.float32, -bound, bound)
    b = jax.random.uniform(kb, (output_dim,), jnp.float32, -bound, bound)
    return w, b


if __name__ == "__main__":
    input_dim, output_dim = 784, 10
    batch = 8

    key = jax.random.PRNGKey(0)
    kx, kp = jax.random.split(key)
    x = jax.random.normal(kx, (batch, input_dim), dtype=jnp.float32)
    w, b = init_params(kp, input_dim, output_dim)

    # One-time: store the weight in the padded transposed kernel layout.
    w_t_pad, b_pad = prepare_params(w, b)

    out = linear_forward(x, w_t_pad, b_pad, d_out=output_dim)
    out = jax.block_until_ready(out)

    # Reference check against plain JAX (same math as torch.nn.Linear forward).
    ref = x @ w.T + b
    assert out.shape == (batch, output_dim)
    assert jnp.allclose(out, ref, atol=1e-5, rtol=1e-5), "mismatch vs reference"

    print("KERNEL_OK")
</pallas_src>

<mosaic_0001>
module attributes {stable_mosaic.version = 11 : i64} {
  func.func @_linear_kernel(%arg0: i32, %arg1: memref<8x896xf32, #tpu.memory_space<vmem>>, %arg2: memref<896x128xf32, #tpu.memory_space<vmem>>, %arg3: memref<1x128xf32, #tpu.memory_space<vmem>>, %arg4: memref<8x128xf32, #tpu.memory_space<vmem>>) attributes {dimension_semantics = [#tpu.dimension_semantics<parallel>], iteration_bounds = array<i64: 1>, scalar_prefetch = 0 : i64, scratch_operands = 0 : i64, tpu.core_type = #tpu.core_type<tc>, window_params = [{transform_indices = @transform_0, window_bounds = array<i64: 8, 896>}, {pipeline_mode = #tpu.pipeline_mode<synchronous>, transform_indices = @transform_1, window_bounds = array<i64: 896, 128>}, {pipeline_mode = #tpu.pipeline_mode<synchronous>, transform_indices = @transform_2, window_bounds = array<i64: 1, 128>}, {transform_indices = @transform_3, window_bounds = array<i64: 8, 128>}]} {
    %c0 = arith.constant 0 : index
    %c0_0 = arith.constant 0 : index
    %0 = vector.load %arg1[%c0, %c0_0] : memref<8x896xf32, #tpu.memory_space<vmem>>, vector<8x896xf32>
    %c0_1 = arith.constant 0 : index
    %c0_2 = arith.constant 0 : index
    %1 = vector.load %arg2[%c0_1, %c0_2] : memref<896x128xf32, #tpu.memory_space<vmem>>, vector<896x128xf32>
    %cst = arith.constant dense<0.000000e+00> : vector<8x128xf32>
    %2 = tpu.matmul %0, %1, %cst {dimension_numbers = #tpu.dot_dimension_numbers<[1], [0], [0], [1], [0, 0, 1, 1], [], []>} : vector<8x896xf32>, vector<896x128xf32>, vector<8x128xf32> -> vector<8x128xf32>
    %c0_3 = arith.constant 0 : index
    %c0_4 = arith.constant 0 : index
    %3 = vector.load %arg3[%c0_3, %c0_4] : memref<1x128xf32, #tpu.memory_space<vmem>>, vector<1x128xf32>
    %4 = vector.broadcast %3 : vector<1x128xf32> to vector<8x128xf32>
    %5 = arith.addf %2, %4 : vector<8x128xf32>
    %c0_5 = arith.constant 0 : index
    %c0_6 = arith.constant 0 : index
    %6 = vector.load %arg4[%c0_5, %c0_6] : memref<8x128xf32, #tpu.memory_space<vmem>>, vector<8x128xf32>
    tpu.vector_store %arg4[%c0_5, %c0_6], %5 {strides = array<i32>} : memref<8x128xf32, #tpu.memory_space<vmem>>, vector<8x128xf32>,
    return
  }
  func.func @transform_0(%arg0: i32) -> (i32, i32) {
    %c0_i32 = arith.constant 0 : i32
    %c0_i32_0 = arith.constant 0 : i32
    return %arg0, %c0_i32 : i32, i32
  }
  func.func @transform_1(%arg0: i32) -> (i32, i32) {
    %c0_i32 = arith.constant 0 : i32
    %c0_i32_0 = arith.constant 0 : i32
    %c0_i32_1 = arith.constant 0 : i32
    return %c0_i32, %c0_i32_0 : i32, i32
  }
  func.func @transform_2(%arg0: i32) -> (i32, i32) {
    %c0_i32 = arith.constant 0 : i32
    %c0_i32_0 = arith.constant 0 : i32
    %c0_i32_1 = arith.constant 0 : i32
    return %c0_i32, %c0_i32_0 : i32, i32
  }
  func.func @transform_3(%arg0: i32) -> (i32, i32) {
    %c0_i32 = arith.constant 0 : i32
    %c0_i32_0 = arith.constant 0 : i32
    return %arg0, %c0_i32 : i32, i32
  }
}

</mosaic_0001>

<llo_original>
// kernel: linear_forward.1
$region0: #{linear_forward.1}
  #allocation0 [shape = 'u32[]', space=smem, size = 0x4, offset = 0x4, fixed_abs, tag = 'smem constant byte address 0x4 - core index']
  #allocation1 [shape = 'u32[144,128]{1,0:T(1,128)}', space=vmem, size = 0x12000, scoped, tag = 'internal scratch']
  %s0 = inlined_call_operand.vmem [shape: f32[8,896], index: 0, kind: input, shape index: {}]
  %s1 = inlined_call_operand.hbm [shape: f32[896,128], index: 1, kind: input, shape index: {}]
  %s2 = inlined_call_operand.vmem [shape: f32[1,128], index: 2, kind: input, shape index: {}]
  %s3 = inlined_call_operand.hbm [shape: f32[8,128], index: 3, kind: output, shape index: {}]
  %s4 = sld [smem:[#allocation0]]
  $region26: #{linear_forward.1} parent=0
    _
  %s6 = ssub.s32 1, %s4
  %s7 = scalar_select 0, %s6, %s4
  $region1: #{linear_forward.1} parent=0
    #allocation2 [shape = 'u8[458752]{0}', space=vmem, size = 0x70000, scoped, tag = 'input window, operand 1, single buffered']
    #allocation3 [shape = 's32[1]{0}', space=sflag, size = 0x4, scoped, tag = 'scoped memory for linear_forward.1']
    #allocation4 [shape = 's32[1]{0}', space=sflag, size = 0x4, scoped, tag = 'scoped memory for linear_forward.1']
    #allocation5 [shape = 'u8[4096]{0}', space=vmem, size = 0x1000, scoped, tag = 'output window, operand 0, single buffered']
    %8 = vsyncpa [#allocation3], 0
    %9 = vsyncpa [#allocation4], 0
    // Predicated region
    $region2: #{linear_forward.1} parent=1 // pred_check
      _
    $region3: #{linear_forward.1} parent=1 // pred_check_branch
      %11 = sbr.rel (0) target = $region5
    $region4: #{linear_forward.1} parent=1 // pred_region
      _
    $region5: #{linear_forward.1} parent=1 // pred_fallthru
      _
    // Predicated region
    $region6: #{linear_forward.1} parent=1 // pred_check
      _
    $region7: #{linear_forward.1} parent=1 // pred_check_branch
      %13 = sbr.rel (0) target = $region9
    $region8: #{linear_forward.1} parent=1 // pred_region
      %s15 = ssub.s32 14336, 14336
      %16 = vsyncadd [#allocation3], %s15
      %s17 = sshll.u32 [#allocation2], 4
      %s18 = int_to_ptr.vmem [resolvable:$true] %s17
      %23 = dma.hbm_to_vmem [thread:$0]  %s1, 14336, %s18, [#allocation3], 128, 128, 8
    $region9: #{linear_forward.1} parent=1 // pred_fallthru
      _
    // Predicated region
    $region10: #{linear_forward.1} parent=1 // pred_check
      _
    $region11: #{linear_forward.1} parent=1 // pred_check_branch
      %25 = sbr.rel (0) target = $region13
    $region12: #{linear_forward.1} parent=1 // pred_region
      _
    $region13: #{linear_forward.1} parent=1 // pred_fallthru
      _
    // Predicated region
    $region14: #{linear_forward.1} parent=1 // pred_check
      _
    $region15: #{linear_forward.1} parent=1 // pred_check_branch
      %27 = sbr.rel (0) target = $region17
    $region16: #{linear_forward.1} parent=1 // pred_region
      %28 = dma.done [#allocation3], 14336
    $region17: #{linear_forward.1} parent=1 // pred_fallthru
      _
    %v29 = vld [vmem:[%s0] sm:$0xff]
    %v30 = vld [vmem:[%s0 + $0x8] sm:$0xff]
    %v31 = vld [vmem:[%s0 + $0x10] sm:$0xff]
    %v32 = vld [vmem:[%s0 + $0x18] sm:$0xff]
    %v33 = vld [vmem:[%s0 + $0x20] sm:$0xff]
    %v34 = vld [vmem:[%s0 + $0x28] sm:$0xff]
    %v35 = vld [vmem:[%s0 + $0x30] sm:$0xff]
    %v36 = vld [vmem:[#allocation2] sm:$0xff]
    %v37 = vld [vmem:[#allocation2 + $0x8] sm:$0xff]
    %v38 = vld [vmem:[#allocation2 + $0x10] sm:$0xff]
    %v39 = vld [vmem:[#allocation2 + $0x18] sm:$0xff]
    %v40 = vld [vmem:[#allocation2 + $0x20] sm:$0xff]
    %v41 = vld [vmem:[#allocation2 + $0x28] sm:$0xff]
    %v42 = vld [vmem:[#allocation2 + $0x30] sm:$0xff]
    %v43 = vld [vmem:[#allocation2 + $0x38] sm:$0xff]
    %v44 = vld [vmem:[#allocation2 + $0x40] sm:$0xff]
    %v45 = vld [vmem:[#allocation2 + $0x48] sm:$0xff]
    %v46 = vld [vmem:[#allocation2 + $0x50] sm:$0xff]
    %v47 = vld [vmem:[#allocation2 + $0x58] sm:$0xff]
    %v48 = vld [vmem:[#allocation2 + $0x60] sm:$0xff]
    %v49 = vld [vmem:[#allocation2 + $0x68] sm:$0xff]
    %v50 = vld [vmem:[#allocation2 + $0x70] sm:$0xff]
    %v51 = vld [vmem:[#allocation2 + $0x78] sm:$0xff]
    %v52 = vld [vmem:[#allocation2 + $0x80] sm:$0xff]
    %v53 = vld [vmem:[#allocation2 + $0x88] sm:$0xff]
    %v54 = vld [vmem:[#allocation2 + $0x90] sm:$0xff]
    %v55 = vld [vmem:[#allocation2 + $0x98] sm:$0xff]
    %v56 = vld [vmem:[#allocation2 + $0xa0] sm:$0xff]
    %v57 = vld [vmem:[#allocation2 + $0xa8] sm:$0xff]
    %v58 = vld [vmem:[#allocation2 + $0xb0] sm:$0xff]
    %v59 = vld [vmem:[#allocation2 + $0xb8] sm:$0xff]
    %v60 = vld [vmem:[#allocation2 + $0xc0] sm:$0xff]
    %v61 = vld [vmem:[#allocation2 + $0xc8] sm:$0xff]
    %v62 = vld [vmem:[#allocation2 + $0xd0] sm:$0xff]
    %v63 = vld [vmem:[#allocation2 + $0xd8] sm:$0xff]
    %v64 = vld [vmem:[#allocation2 + $0xe0] sm:$0xff]
    %v65 = vld [vmem:[#allocation2 + $0xe8] sm:$0xff]
    %v66 = vld [vmem:[#allocation2 + $0xf0] sm:$0xff]
    %v67 = vld [vmem:[#allocation2 + $0xf8] sm:$0xff]
    %v68 = vld [vmem:[#allocation2 + $0x100] sm:$0xff]
    %v69 = vld [vmem:[#allocation2 + $0x108] sm:$0xff]
    %v70 = vld [vmem:[#allocation2 + $0x110] sm:$0xff]
    %v71 = vld [vmem:[#allocation2 + $0x118] sm:$0xff]
    %v72 = vld [vmem:[#allocation2 + $0x120] sm:$0xff]
    %v73 = vld [vmem:[#allocation2 + $0x128] sm:$0xff]
    %v74 = vld [vmem:[#allocation2 + $0x130] sm:$0xff]
    %v75 = vld [vmem:[#allocation2 + $0x138] sm:$0xff]
    %v76 = vld [vmem:[#allocation2 + $0x140] sm:$0xff]
    %v77 = vld [vmem:[#allocation2 + $0x148] sm:$0xff]
    %v78 = vld [vmem:[#allocation2 + $0x150] sm:$0xff]
    %v79 = vld [vmem:[#allocation2 + $0x158] sm:$0xff]
    %v80 = vld [vmem:[#allocation2 + $0x160] sm:$0xff]
    %v81 = vld [vmem:[#allocation2 + $0x168] sm:$0xff]
    %v82 = vld [vmem:[#allocation2 + $0x170] sm:$0xff]
    %v83 = vld [vmem:[#allocation2 + $0x178] sm:$0xff]
    %v84 = vld [vmem:[#allocation2 + $0x180] sm:$0xff]
    %v85 = vld [vmem:[#allocation2 + $0x188] sm:$0xff]
    %v86 = vld [vmem:[#allocation2 + $0x190] sm:$0xff]
    %v87 = vld [vmem:[#allocation2 + $0x198] sm:$0xff]
    %v88 = vld [vmem:[#allocation2 + $0x1a0] sm:$0xff]
    %v89 = vld [vmem:[#allocation2 + $0x1a8] sm:$0xff]
    %v90 = vld [vmem:[#allocation2 + $0x1b0] sm:$0xff]
    %v91 = vld [vmem:[#allocation2 + $0x1b8] sm:$0xff]
    %v92 = vld [vmem:[#allocation2 + $0x1c0] sm:$0xff]
    %v93 = vld [vmem:[#allocation2 + $0x1c8] sm:$0xff]
    %v94 = vld [vmem:[#allocation2 + $0x1d0] sm:$0xff]
    %v95 = vld [vmem:[#allocation2 + $0x1d8] sm:$0xff]
    %v96 = vld [vmem:[#allocation2 + $0x1e0] sm:$0xff]
    %v97 = vld [vmem:[#allocation2 + $0x1e8] sm:$0xff]
    %v98 = vld [vmem:[#allocation2 + $0x1f0] sm:$0xff]
    %v99 = vld [vmem:[#allocation2 + $0x1f8] sm:$0xff]
    %v100 = vld [vmem:[#allocation2 + $0x200] sm:$0xff]
    %v101 = vld [vmem:[#allocation2 + $0x208] sm:$0xff]
    %v102 = vld [vmem:[#allocation2 + $0x210] sm:$0xff]
    %v103 = vld [vmem:[#allocation2 + $0x218] sm:$0xff]
    %v104 = vld [vmem:[#allocation2 + $0x220] sm:$0xff]
    %v105 = vld [vmem:[#allocation2 + $0x228] sm:$0xff]
    %v106 = vld [vmem:[#allocation2 + $0x230] sm:$0xff]
    %v107 = vld [vmem:[#allocation2 + $0x238] sm:$0xff]
    %v108 = vld [vmem:[#allocation2 + $0x240] sm:$0xff]
    %v109 = vld [vmem:[#allocation2 + $0x248] sm:$0xff]
    %v110 = vld [vmem:[#allocation2 + $0x250] sm:$0xff]
    %v111 = vld [vmem:[#allocation2 + $0x258] sm:$0xff]
    %v112 = vld [vmem:[#allocation2 + $0x260] sm:$0xff]
    %v113 = vld [vmem:[#allocation2 + $0x268] sm:$0xff]
    %v114 = vld [vmem:[#allocation2 + $0x270] sm:$0xff]
    %v115 = vld [vmem:[#allocation2 + $0x278] sm:$0xff]
    %v116 = vld [vmem:[#allocation2 + $0x280] sm:$0xff]
    %v117 = vld [vmem:[#allocation2 + $0x288] sm:$0xff]
    %v118 = vld [vmem:[#allocation2 + $0x290] sm:$0xff]
    %v119 = vld [vmem:[#allocation2 + $0x298] sm:$0xff]
    %v120 = vld [vmem:[#allocation2 + $0x2a0] sm:$0xff]
    %v121 = vld [vmem:[#allocation2 + $0x2a8] sm:$0xff]
    %v122 = vld [vmem:[#allocation2 + $0x2b0] sm:$0xff]
    %v123 = vld [vmem:[#allocation2 + $0x2b8] sm:$0xff]
    %v124 = vld [vmem:[#allocation2 + $0x2c0] sm:$0xff]
    %v125 = vld [vmem:[#allocation2 + $0x2c8] sm:$0xff]
    %v126 = vld [vmem:[#allocation2 + $0x2d0] sm:$0xff]
    %v127 = vld [vmem:[#allocation2 + $0x2d8] sm:$0xff]
    %v128 = vld [vmem:[#allocation2 + $0x2e0] sm:$0xff]
    %v129 = vld [vmem:[#allocation2 + $0x2e8] sm:$0xff]
    %v130 = vld [vmem:[#allocation2 + $0x2f0] sm:$0xff]
    %v131 = vld [vmem:[#allocation2 + $0x2f8] sm:$0xff]
    %v132 = vld [vmem:[#allocation2 + $0x300] sm:$0xff]
    %v133 = vld [vmem:[#allocation2 + $0x308] sm:$0xff]
    %v134 = vld [vmem:[#allocation2 + $0x310] sm:$0xff]
    %v135 = vld [vmem:[#allocation2 + $0x318] sm:$0xff]
    %v136 = vld [vmem:[#allocation2 + $0x320] sm:$0xff]
    %v137 = vld [vmem:[#allocation2 + $0x328] sm:$0xff]
    %v138 = vld [vmem:[#allocation2 + $0x330] sm:$0xff]
    %v139 = vld [vmem:[#allocation2 + $0x338] sm:$0xff]
    %v140 = vld [vmem:[#allocation2 + $0x340] sm:$0xff]
    %v141 = vld [vmem:[#allocation2 + $0x348] sm:$0xff]
    %v142 = vld [vmem:[#allocation2 + $0x350] sm:$0xff]
    %v143 = vld [vmem:[#allocation2 + $0x358] sm:$0xff]
    %v144 = vld [vmem:[#allocation2 + $0x360] sm:$0xff]
    %v145 = vld [vmem:[#allocation2 + $0x368] sm:$0xff]
    %v146 = vld [vmem:[#allocation2 + $0x370] sm:$0xff]
    %v147 = vld [vmem:[#allocation2 + $0x378] sm:$0xff]
    %v148 = vld [vmem:[%s2] sm:$0x1]
    %v150 = vlaneseq
    %v151 = vshrl.u32 %v150, 7
    %v152 = vsub.s32 0, %v151
    %v153 = vrot.slane %v148, %v152
    %155 = vmatprep.subr.mxu0 0.0
    %156 = vmatpush1.msra.mxu0 %v36
    %157 = vmatprep.subr.mxu0 0.0
    %158 = vmatpush1.msra.mxu0 %v37
    %159 = vmatprep.subr.mxu0 0.0
    %160 = vmatpush1.msra.mxu0 %v38
    %161 = vmatprep.subr.mxu0 0.0
    %162 = vmatpush1.msra.mxu0 %v39
    %163 = vmatprep.subr.mxu0 0.0
    %164 = vmatpush1.msra.mxu0 %v40
    %165 = vmatprep.subr.mxu0 0.0
    %166 = vmatpush1.msra.mxu0 %v41
    %167 = vmatprep.subr.mxu0 0.0
    %168 = vmatpush1.msra.mxu0 %v42
    %169 = vmatprep.subr.mxu0 0.0
    %170 = vmatpush1.msra.mxu0 %v43
    %171 = vmatprep.subr.mxu0 0.0
    %172 = vmatpush1.msra.mxu0 %v44
    %173 = vmatprep.subr.mxu0 0.0
    %174 = vmatpush1.msra.mxu0 %v45
    %175 = vmatprep.subr.mxu0 0.0
    %176 = vmatpush1.msra.mxu0 %v46
    %177 = vmatprep.subr.mxu0 0.0
    %178 = vmatpush1.msra.mxu0 %v47
    %179 = vmatprep.subr.mxu0 0.0
    %180 = vmatpush1.msra.mxu0 %v48
    %181 = vmatprep.subr.mxu0 0.0
    %182 = vmatpush1.msra.mxu0 %v49
    %183 = vmatprep.subr.mxu0 0.0
    %184 = vmatpush1.msra.mxu0 %v50
    %185 = vmatprep.subr.mxu0 0.0
    %186 = vmatpush1.msra.mxu0 %v51
    %187 = vmatprep.subr.mxu0 0.0
    %188 = vmatpush1.msra.mxu0 %v52
    %189 = vmatprep.subr.mxu0 0.0
    %190 = vmatpush1.msra.mxu0 %v53
    %191 = vmatprep.subr.mxu0 0.0
    %192 = vmatpush1.msra.mxu0 %v54
    %193 = vmatprep.subr.mxu0 0.0
    %194 = vmatpush1.msra.mxu0 %v55
    %195 = vmatprep.subr.mxu0 0.0
    %196 = vmatpush1.msra.mxu0 %v56
    %197 = vmatprep.subr.mxu0 0.0
    %198 = vmatpush1.msra.mxu0 %v57
    %199 = vmatprep.subr.mxu0 0.0
    %200 = vmatpush1.msra.mxu0 %v58
    %201 = vmatprep.subr.mxu0 0.0
    %202 = vmatpush1.msra.mxu0 %v59
    %203 = vmatprep.subr.mxu0 0.0
    %204 = vmatpush1.msra.mxu0 %v60
    %205 = vmatprep.subr.mxu0 0.0
    %206 = vmatpush1.msra.mxu0 %v61
    %207 = vmatprep.subr.mxu0 0.0
    %208 = vmatpush1.msra.mxu0 %v62
    %209 = vmatprep.subr.mxu0 0.0
    %210 = vmatpush1.msra.mxu0 %v63
    %211 = vmatprep.subr.mxu0 0.0
    %212 = vmatpush1.msra.mxu0 %v64
    %213 = vmatprep.subr.mxu0 0.0
    %214 = vmatpush1.msra.mxu0 %v65
    %215 = vmatprep.subr.mxu0 0.0
    %216 = vmatpush1.msra.mxu0 %v66
    %217 = vmatprep.subr.mxu0 0.0
    %218 = vmatpush1.msra.mxu0 %v67
    %219 = vmatprep.mubr.f32.mxu0 %v30
    %220 = vmatmul.mubr.f32.gmra.mrb[0].mxu0 %v29
    %v221 = vpop.f32.mrb[0].mxu0
    %v222 = vadd.f32 %v153, %v221
    %v223 = vpop.f32.mrb[0].mxu0
    %224 = vdwg.mxu0
    %225 = vmatprep.subr.mxu0 0.0
    %226 = vmatpush1.msra.mxu0 %v68
    %227 = vmatprep.subr.mxu0 0.0
    %228 = vmatpush1.msra.mxu0 %v69
    %229 = vmatprep.subr.mxu0 0.0
    %230 = vmatpush1.msra.mxu0 %v70
    %231 = vmatprep.subr.mxu0 0.0
    %232 = vmatpush1.msra.mxu0 %v71
    %233 = vmatprep.subr.mxu0 0.0
    %234 = vmatpush1.msra.mxu0 %v72
    %235 = vmatprep.subr.mxu0 0.0
    %236 = vmatpush1.msra.mxu0 %v73
    %237 = vmatprep.subr.mxu0 0.0
    %238 = vmatpush1.msra.mxu0 %v74
    %239 = vmatprep.subr.mxu0 0.0
    %240 = vmatpush1.msra.mxu0 %v75
    %241 = vmatprep.subr.mxu0 0.0
    %242 = vmatpush1.msra.mxu0 %v76
    %243 = vmatprep.subr.mxu0 0.0
    %244 = vmatpush1.msra.mxu0 %v77
    %245 = vmatprep.subr.mxu0 0.0
    %246 = vmatpush1.msra.mxu0 %v78
    %247 = vmatprep.subr.mxu0 0.0
    %248 = vmatpush1.msra.mxu0 %v79
    %249 = vmatprep.subr.mxu0 0.0
    %250 = vmatpush1.msra.mxu0 %v80
    %251 = vmatprep.subr.mxu0 0.0
    %252 = vmatpush1.msra.mxu0 %v81
    %253 = vmatprep.subr.mxu0 0.0
    %254 = vmatpush1.msra.mxu0 %v82
    %255 = vmatprep.subr.mxu0 0.0
    %256 = vmatpush1.msra.mxu0 %v83
    %257 = vmatprep.subr.mxu0 0.0
    %258 = vmatpush1.msra.mxu0 %v84
    %259 = vmatprep.subr.mxu0 0.0
    %260 = vmatpush1.msra.mxu0 %v85
    %261 = vmatprep.subr.mxu0 0.0
    %262 = vmatpush1.msra.mxu0 %v86
    %263 = vmatprep.subr.mxu0 0.0
    %264 = vmatpush1.msra.mxu0 %v87
    %265 = vmatprep.subr.mxu0 0.0
    %266 = vmatpush1.msra.mxu0 %v88
    %267 = vmatprep.subr.mxu0 0.0
    %268 = vmatpush1.msra.mxu0 %v89
    %269 = vmatprep.subr.mxu0 0.0
    %270 = vmatpush1.msra.mxu0 %v90
    %271 = vmatprep.subr.mxu0 0.0
    %272 = vmatpush1.msra.mxu0 %v91
    %273 = vmatprep.subr.mxu0 0.0
    %274 = vmatpush1.msra.mxu0 %v92
    %275 = vmatprep.subr.mxu0 0.0
    %276 = vmatpush1.msra.mxu0 %v93
    %277 = vmatprep.subr.mxu0 0.0
    %278 = vmatpush1.msra.mxu0 %v94
    %279 = vmatprep.subr.mxu0 0.0
    %280 = vmatpush1.msra.mxu0 %v95
    %281 = vmatprep.subr.mxu0 0.0
    %282 = vmatpush1.msra.mxu0 %v96
    %283 = vmatprep.subr.mxu0 0.0
    %284 = vmatpush1.msra.mxu0 %v97
    %285 = vmatprep.subr.mxu0 0.0
    %286 = vmatpush1.msra.mxu0 %v98
    %287 = vmatprep.subr.mxu0 0.0
    %288 = vmatpush1.msra.mxu0 %v99
    %289 = vmatprep.mubr.f32.mxu0 %v32
    %290 = vmatmul.mubr.f32.gmra.mrb[0].mxu0 %v31
    %v291 = vpop.f32.mrb[0].mxu0
    %v292 = vadd.f32 %v222, %v291
    %v293 = vpop.f32.mrb[0].mxu0
    %294 = vdwg.mxu0
    %295 = vmatprep.subr.mxu0 0.0
    %296 = vmatpush1.msra.mxu0 %v100
    %297 = vmatprep.subr.mxu0 0.0
    %298 = vmatpush1.msra.mxu0 %v101
    %299 = vmatprep.subr.mxu0 0.0
    %300 = vmatpush1.msra.mxu0 %v102
    %301 = vmatprep.subr.mxu0 0.0
    %302 = vmatpush1.msra.mxu0 %v103
    %303 = vmatprep.subr.mxu0 0.0
    %304 = vmatpush1.msra.mxu0 %v104
    %305 = vmatprep.subr.mxu0 0.0
    %306 = vmatpush1.msra.mxu0 %v105
    %307 = vmatprep.subr.mxu0 0.0
    %308 = vmatpush1.msra.mxu0 %v106
    %309 = vmatprep.subr.mxu0 0.0
    %310 = vmatpush1.msra.mxu0 %v107
    %311 = vmatprep.subr.mxu0 0.0
    %312 = vmatpush1.msra.mxu0 %v108
    %313 = vmatprep.subr.mxu0 0.0
    %314 = vmatpush1.msra.mxu0 %v109
    %315 = vmatprep.subr.mxu0 0.0
    %316 = vmatpush1.msra.mxu0 %v110
    %317 = vmatprep.subr.mxu0 0.0
    %318 = vmatpush1.msra.mxu0 %v111
    %319 = vmatprep.subr.mxu0 0.0
    %320 = vmatpush1.msra.mxu0 %v112
    %321 = vmatprep.subr.mxu0 0.0
    %322 = vmatpush1.msra.mxu0 %v113
    %323 = vmatprep.subr.mxu0 0.0
    %324 = vmatpush1.msra.mxu0 %v114
    %325 = vmatprep.subr.mxu0 0.0
    %326 = vmatpush1.msra.mxu0 %v115
    %327 = vmatprep.subr.mxu0 0.0
    %328 = vmatpush1.msra.mxu0 %v116
    %329 = vmatprep.subr.mxu0 0.0
    %330 = vmatpush1.msra.mxu0 %v117
    %331 = vmatprep.subr.mxu0 0.0
    %332 = vmatpush1.msra.mxu0 %v118
    %333 = vmatprep.subr.mxu0 0.0
    %334 = vmatpush1.msra.mxu0 %v119
    %335 = vmatprep.subr.mxu0 0.0
    %336 = vmatpush1.msra.mxu0 %v120
    %337 = vmatprep.subr.mxu0 0.0
    %338 = vmatpush1.msra.mxu0 %v121
    %339 = vmatprep.subr.mxu0 0.0
    %340 = vmatpush1.msra.mxu0 %v122
    %341 = vmatprep.subr.mxu0 0.0
    %342 = vmatpush1.msra.mxu0 %v123
    %343 = vmatprep.subr.mxu0 0.0
    %344 = vmatpush1.msra.mxu0 %v124
    %345 = vmatprep.subr.mxu0 0.0
    %346 = vmatpush1.msra.mxu0 %v125
    %347 = vmatprep.subr.mxu0 0.0
    %348 = vmatpush1.msra.mxu0 %v126
    %349 = vmatprep.subr.mxu0 0.0
    %350 = vmatpush1.msra.mxu0 %v127
    %351 = vmatprep.subr.mxu0 0.0
    %352 = vmatpush1.msra.mxu0 %v128
    %353 = vmatprep.subr.mxu0 0.0
    %354 = vmatpush1.msra.mxu0 %v129
    %355 = vmatprep.subr.mxu0 0.0
    %356 = vmatpush1.msra.mxu0 %v130
    %357 = vmatprep.subr.mxu0 0.0
    %358 = vmatpush1.msra.mxu0 %v131
    %359 = vmatprep.mubr.f32.mxu0 %v34
    %360 = vmatmul.mubr.f32.gmra.mrb[0].mxu0 %v33
    %v361 = vpop.f32.mrb[0].mxu0
    %v362 = vadd.f32 %v292, %v361
    %v363 = vpop.f32.mrb[0].mxu0
    %364 = vdwg.mxu0
    %365 = vmatprep.subr.mxu0 0.0
    %366 = vmatpush1.msra.mxu0 %v132
    %367 = vmatprep.subr.mxu0 0.0
    %368 = vmatpush1.msra.mxu0 %v133
    %369 = vmatprep.subr.mxu0 0.0
    %370 = vmatpush1.msra.mxu0 %v134
    %371 = vmatprep.subr.mxu0 0.0
    %372 = vmatpush1.msra.mxu0 %v135
    %373 = vmatprep.subr.mxu0 0.0
    %374 = vmatpush1.msra.mxu0 %v136
    %375 = vmatprep.subr.mxu0 0.0
    %376 = vmatpush1.msra.mxu0 %v137
    %377 = vmatprep.subr.mxu0 0.0
    %378 = vmatpush1.msra.mxu0 %v138
    %379 = vmatprep.subr.mxu0 0.0
    %380 = vmatpush1.msra.mxu0 %v139
    %381 = vmatprep.subr.mxu0 0.0
    %382 = vmatpush1.msra.mxu0 %v140
    %383 = vmatprep.subr.mxu0 0.0
    %384 = vmatpush1.msra.mxu0 %v141
    %385 = vmatprep.subr.mxu0 0.0
    %386 = vmatpush1.msra.mxu0 %v142
    %387 = vmatprep.subr.mxu0 0.0
    %388 = vmatpush1.msra.mxu0 %v143
    %389 = vmatprep.subr.mxu0 0.0
    %390 = vmatpush1.msra.mxu0 %v144
    %391 = vmatprep.subr.mxu0 0.0
    %392 = vmatpush1.msra.mxu0 %v145
    %393 = vmatprep.subr.mxu0 0.0
    %394 = vmatpush1.msra.mxu0 %v146
    %395 = vmatprep.subr.mxu0 0.0
    %396 = vmatpush1.msra.mxu0 %v147
    %397 = vmatprep.subr.mxu0 0.0
    %398 = vmatpush1.msra.mxu0 0.0
    %399 = vmatprep.subr.mxu0 0.0
    %400 = vmatpush1.msra.mxu0 0.0
    %401 = vmatprep.subr.mxu0 0.0
    %402 = vmatpush1.msra.mxu0 0.0
    %403 = vmatprep.subr.mxu0 0.0
    %404 = vmatpush1.msra.mxu0 0.0
    %405 = vmatprep.subr.mxu0 0.0
    %406 = vmatpush1.msra.mxu0 0.0
    %407 = vmatprep.subr.mxu0 0.0
    %408 = vmatpush1.msra.mxu0 0.0
    %409 = vmatprep.subr.mxu0 0.0
    %410 = vmatpush1.msra.mxu0 0.0
    %411 = vmatprep.subr.mxu0 0.0
    %412 = vmatpush1.msra.mxu0 0.0
    %413 = vmatprep.subr.mxu0 0.0
    %414 = vmatpush1.msra.mxu0 0.0
    %415 = vmatprep.subr.mxu0 0.0
    %416 = vmatpush1.msra.mxu0 0.0
    %417 = vmatprep.subr.mxu0 0.0
    %418 = vmatpush1.msra.mxu0 0.0
    %419 = vmatprep.subr.mxu0 0.0
    %420 = vmatpush1.msra.mxu0 0.0
    %421 = vmatprep.subr.mxu0 0.0
    %422 = vmatpush1.msra.mxu0 0.0
    %423 = vmatprep.subr.mxu0 0.0
    %424 = vmatpush1.msra.mxu0 0.0
    %425 = vmatprep.subr.mxu0 0.0
    %426 = vmatpush1.msra.mxu0 0.0
    %427 = vmatprep.subr.mxu0 0.0
    %428 = vmatpush1.msra.mxu0 0.0
    %429 = vmatprep.mubr.f32.mxu0 0.0
    %430 = vmatmul.mubr.f32.gmra.mrb[0].mxu0 %v35
    %v431 = vpop.f32.mrb[0].mxu0
    %v432 = vadd.f32 %v362, %v431
    %v433 = vpop.f32.mrb[0].mxu0
    %434 = vdwg.mxu0
    %435 = vst [vmem:[#allocation5] sm:$0xff] %v432
    // Predicated region
    $region18: #{linear_forward.1} parent=1 // pred_check
      _
    $region19: #{linear_forward.1} parent=1 // pred_check_branch
      %437 = sbr.rel (0) target = $region21
    $region20: #{linear_forward.1} parent=1 // pred_region
      %s439 = ssub.s32 128, 128
      %440 = vsyncadd [#allocation4], %s439
      %s442 = sshll.u32 [#allocation5], 4
      %s443 = int_to_ptr.vmem [resolvable:$true] %s442
      %445 = dma.vmem_to_hbm [thread:$0]  %s443, 128, %s3, [#allocation4]
    $region21: #{linear_forward.1} parent=1 // pred_fallthru
      _
    // Predicated region
    $region22: #{linear_forward.1} parent=1 // pred_check
      _
    $region23: #{linear_forward.1} parent=1 // pred_check_branch
      %447 = sbr.rel (0) target = $region25
    $region24: #{linear_forward.1} parent=1 // pred_region
      %448 = dma.done [#allocation4], 128
    $region25: #{linear_forward.1} parent=1 // pred_fallthru
      _
    %449 = vsyncpa [#allocation3], 1
    %450 = vsyncpa [#allocation4], 1

</llo_original>
